<compile_context>
chip_gen: v7x
topology: tpu7x:2x2x1
jax: 0.10.0
libtpu: 0.0.40
codegen_flags: <defaults>
</compile_context>

<pallas_src>
import functools
import math

import jax
import jax.numpy as jnp
import numpy as np
from jax import lax
from jax.experimental import pallas as pl
from jax.experimental.pallas import tpu as pltpu

LANE = 128


def _round_up(v, m):
    return ((v + m - 1) // m) * m


def _choose_q_tile(n):
    """Largest query-tile (<=512) that divides N; falls back to N (no tiling)."""
    if n <= 512:
        return n
    for t in (512, 256, 128, 64, 32, 16, 8):
        if n % t == 0:
            return t
    return n


# ----------------------------------------------------------------------------- kernel


def _attention_layer(x, w, b, res_from_y, out_ref, *, hp, tq):
    """One embedded-dot-product attention layer; writes the new x into out_ref.

    x : [N, Cin] value (old x)
    w : [Cin, 4*hp] (layer 0: Q|K|V|Res) or [hp, 3*hp] (later layers: Q|K|V),
        with the 1/sqrt(relation_dim) scale already folded into the Q slice.
    b : [1, 4*hp] or [1, 3*hp]
    res_from_y: layer 0 -> residual is the packed Wres slice of y;
                later layers -> residual is the old x tile read from out_ref
                just before that tile is overwritten.
    """
    n = out_ref.shape[0]
    nq = n // tq
    # Single fused lane-dense projection for Q, K, V (and the layer-0 residual).
    y = jnp.dot(x, w, preferred_element_type=jnp.float32) + b
    xq = y[:, 0 * hp:1 * hp]
    xk = y[:, 1 * hp:2 * hp]
    xv = y[:, 2 * hp:3 * hp]

    for qi in range(nq):                       # static trip count (tq divides n)
        lo = qi * tq
        rows = pl.ds(lo, tq)
        # Contract over the feature dim of both operands (no explicit xk.T).
        att = lax.dot_general(xq[lo:lo + tq, :], xk,
                              dimension_numbers=(((1,), (1,)), ((), ())),
                              preferred_element_type=jnp.float32)     # [tq, n]
        att = att - jnp.max(att, axis=-1, keepdims=True)
        p = jnp.exp(att)                                              # unnormalized
        denom = jnp.sum(p, axis=-1, keepdims=True)                    # [tq, 1] > 0
        agg = jnp.dot(p, xv, preferred_element_type=jnp.float32)      # P @ V first
        if res_from_y:
            res = y[lo:lo + tq, 3 * hp:4 * hp]
        else:
            res = out_ref[rows, :]           # old x tile, read just before overwrite
        # relu(agg) * (1/denom) == relu(agg/denom): softmax normalization deferred
        # past the PV matmul -> N*H multiplies instead of N*N.
        out_ref[rows, :] = (jnp.maximum(agg, 0.0)
                            * pl.reciprocal(denom, approx=False) + res)


def _semantic_graph_kernel(x_ref, w0_ref, b0_ref, ws_ref, bs_ref, out_ref, *,
                           hp, tq, num_layers):
    # Layer 0: residual = x @ Wres + bres, packed as the 4th slice of w0/b0.
    _attention_layer(x_ref[...], w0_ref[...], b0_ref[...], True, out_ref,
                     hp=hp, tq=tq)
    # Layers 1..L-1: fully VMEM-resident weight stack, unrolled fori_loop
    # (no grid -> no per-layer pipeline overhead).
    if num_layers > 1:
        def layer_body(l, carry):
            _attention_layer(out_ref[...], ws_ref[l], bs_ref[l], False, out_ref,
                             hp=hp, tq=tq)
            return carry

        lax.fori_loop(0, num_layers - 1, layer_body, 0, unroll=True)


# ----------------------------------------------------------------------------- wrapper


def semantic_graph_forward(x, params, hidden_dim):
    """params: per-layer lists 'wq','bq','wk','bk','wv','bv' (weights stored as
    [in_dim, out_dim]) plus 'wres','bres' for the layer-0 residual projection."""
    num_layers = len(params["wq"])
    n, input_dim = x.shape
    h = hidden_dim
    hp = _round_up(h, LANE)                    # lane-dense padded hidden size
    scale = 1.0 / math.sqrt(h)                 # relation_dim == hidden_dim
    tq = _choose_q_tile(n)                     # query-tile; att VMEM is [tq, n]
    x = x.astype(jnp.float32)

    def pad_cols(a):                           # [r, h] -> [r, hp] (zero cols)
        a = a.astype(jnp.float32)
        return jnp.pad(a, ((0, 0), (0, hp - a.shape[1])))

    def pad_full(a):                           # [h, h] -> [hp, hp] (zero rows+cols)
        a = a.astype(jnp.float32)
        return jnp.pad(a, ((0, hp - a.shape[0]), (0, hp - a.shape[1])))

    # Layer 0: packed [Wq*scale | Wk | Wv | Wres]  -> [input_dim, 4*hp]
    w0 = jnp.concatenate([pad_cols(params["wq"][0] * scale), pad_cols(params["wk"][0]),
                          pad_cols(params["wv"][0]), pad_cols(params["wres"])], axis=1)
    b0 = jnp.concatenate([pad_cols(params["bq"][0] * scale), pad_cols(params["bk"][0]),
                          pad_cols(params["bv"][0]), pad_cols(params["bres"])], axis=1)

    # Layers 1..L-1: packed [Wq*scale | Wk | Wv] only (residual is + x, no identity
    # matmul).  Dummy (unused) stack when num_layers == 1.
    if num_layers > 1:
        ws = [jnp.concatenate([pad_full(params["wq"][i] * scale),
                               pad_full(params["wk"][i]),
                               pad_full(params["wv"][i])], axis=1)
              for i in range(1, num_layers)]
        bs = [jnp.concatenate([pad_cols(params["bq"][i] * scale),
                               pad_cols(params["bk"][i]),
                               pad_cols(params["bv"][i])], axis=1)
              for i in range(1, num_layers)]
        w_stack = jnp.stack(ws)                # [L-1, hp, 3*hp]
        b_stack = jnp.stack(bs)                # [L-1, 1, 3*hp]
    else:
        w_stack = jnp.zeros((1, hp, 3 * hp), jnp.float32)
        b_stack = jnp.zeros((1, 1, 3 * hp), jnp.float32)

    # Explicit scoped-VMEM budget (x in, running x, packed y, att tile, weights)
    # with 2x headroom, clamped to something valid on every generation (v7x: 64 MiB).
    est_bytes = 4 * (n * input_dim + n * hp + 4 * n * hp + 2 * tq * n
                     + w0.size + b0.size + w_stack.size + b_stack.size)
    vmem_limit = int(min(max(2 * est_bytes, 32 * 2**20), 64 * 2**20))

    vmem_specs = [pl.BlockSpec(memory_space=pltpu.MemorySpace.VMEM) for _ in range(5)]
    aliases = {0: 0} if input_dim == hp else {}   # write result in place when legal

    out = pl.pallas_call(
        functools.partial(_semantic_graph_kernel, hp=hp, tq=tq,
                          num_layers=num_layers),
        out_shape=jax.ShapeDtypeStruct((n, hp), jnp.float32),
        in_specs=vmem_specs,
        out_specs=pl.BlockSpec(memory_space=pltpu.MemorySpace.VMEM),
        input_output_aliases=aliases,
        compiler_params=pltpu.CompilerParams(vmem_limit_bytes=vmem_limit),
    )(x, w0, b0, w_stack, b_stack)

    return out[:, :h] if hp != h else out


# ----------------------------------------------------------------------------- params / reference


def _linear_init(key, fan_in, fan_out):
    # Mirrors torch.nn.Linear default init; weight stored as [in, out], bias as [1, out].
    kw, kb = jax.random.split(key)
    bound = 1.0 / math.sqrt(fan_in)
    w = jax.random.uniform(kw, (fan_in, fan_out), jnp.float32, -bound, bound)
    b = jax.random.uniform(kb, (1, fan_out), jnp.float32, -bound, bound)
    return w, b


def make_params(key, input_dim, hidden_dim, num_layers):
    params = {"wq": [], "bq": [], "wk": [], "bk": [], "wv": [], "bv": []}
    for i in range(num_layers):
        in_dim = input_dim if i == 0 else hidden_dim
        key, kq, kk, kv = jax.random.split(key, 4)
        wq, bq = _linear_init(kq, in_dim, hidden_dim)
        wk, bk = _linear_init(kk, in_dim, hidden_dim)
        wv, bv = _linear_init(kv, in_dim, hidden_dim)
        params["wq"].append(wq); params["bq"].append(bq)
        params["wk"].append(wk); params["bk"].append(bk)
        params["wv"].append(wv); params["bv"].append(bv)
    key, kres = jax.random.split(key)
    params["wres"], params["bres"] = _linear_init(kres, input_dim, hidden_dim)
    return params


def reference_forward(x, params, hidden_dim):
    # Pure-JAX reference mirroring the PyTorch forward (unpacked, unscaled weights).
    num_layers = len(params["wq"])
    scale = 1.0 / math.sqrt(hidden_dim)
    for i in range(num_layers):
        xq = x @ params["wq"][i] + params["bq"][i]
        xk = x @ params["wk"][i] + params["bk"][i]
        xv = x @ params["wv"][i] + params["bv"][i]
        att = jax.nn.softmax((xq @ xk.T) * scale, axis=-1)
        agg = jax.nn.relu(att @ xv)
        if i == 0:
            x = agg + (x @ params["wres"] + params["bres"])
        else:
            x = agg + x
    return x


# ----------------------------------------------------------------------------- main


if __name__ == "__main__":
    key = jax.random.PRNGKey(0)

    cases = [
        # (num_nodes, input_dim, hidden_dim, num_layers)
        (8, 32, 32, 2),      # input_dim == hidden_dim, padded H (32 -> 128)
        (8, 64, 32, 3),      # input_dim != hidden_dim, layer 0 fused in-kernel
        (16, 128, 128, 2),   # already lane-dense, exercises input/output aliasing
        (8, 48, 32, 1),      # single layer (dummy weight-stack path)
    ]
    for (num_nodes, input_dim, hidden_dim, num_layers) in cases:
        key, kx, kp = jax.random.split(key, 3)
        x = jax.random.normal(kx, (num_nodes, input_dim), jnp.float32)
        params = make_params(kp, input_dim, hidden_dim, num_layers)
        out = jax.block_until_ready(semantic_graph_forward(x, params, hidden_dim))
        ref = reference_forward(x, params, hidden_dim)
        np.testing.assert_allclose(np.asarray(out), np.asarray(ref),
                                   rtol=1e-5, atol=1e-5)

    print("KERNEL_OK")
</pallas_src>

<mosaic_0001>
module attributes {stable_mosaic.version = 11 : i64} {
  func.func @_semantic_graph_kernel(%arg0: memref<8x32xf32, #tpu.memory_space<vmem>>, %arg1: memref<32x512xf32, #tpu.memory_space<vmem>>, %arg2: memref<1x512xf32, #tpu.memory_space<vmem>>, %arg3: memref<1x128x384xf32, #tpu.memory_space<vmem>>, %arg4: memref<1x1x384xf32, #tpu.memory_space<vmem>>, %arg5: memref<8x128xf32, #tpu.memory_space<vmem>>) attributes {dimension_semantics = [], scalar_prefetch = 0 : i64, scratch_operands = 0 : i64, tpu.core_type = #tpu.core_type<tc>} {
    %c0 = arith.constant 0 : index
    %c0_0 = arith.constant 0 : index
    %0 = vector.load %arg0[%c0, %c0_0] : memref<8x32xf32, #tpu.memory_space<vmem>>, vector<8x32xf32>
    %c0_1 = arith.constant 0 : index
    %c0_2 = arith.constant 0 : index
    %1 = vector.load %arg1[%c0_1, %c0_2] : memref<32x512xf32, #tpu.memory_space<vmem>>, vector<32x512xf32>
    %c0_3 = arith.constant 0 : index
    %c0_4 = arith.constant 0 : index
    %2 = vector.load %arg2[%c0_3, %c0_4] : memref<1x512xf32, #tpu.memory_space<vmem>>, vector<1x512xf32>
    %cst = arith.constant dense<0.000000e+00> : vector<8x512xf32>
    %3 = tpu.matmul %0, %1, %cst {dimension_numbers = #tpu.dot_dimension_numbers<[1], [0], [0], [1], [0, 0, 1, 1], [], []>} : vector<8x32xf32>, vector<32x512xf32>, vector<8x512xf32> -> vector<8x512xf32>
    %4 = vector.broadcast %2 : vector<1x512xf32> to vector<8x512xf32>
    %5 = arith.addf %3, %4 : vector<8x512xf32>
    %6 = vector.extract_strided_slice %5 {offsets = [0, 0], sizes = [8, 128], strides = [1, 1]} : vector<8x512xf32> to vector<8x128xf32>
    %7 = vector.extract_strided_slice %5 {offsets = [0, 128], sizes = [8, 128], strides = [1, 1]} : vector<8x512xf32> to vector<8x128xf32>
    %8 = vector.extract_strided_slice %5 {offsets = [0, 256], sizes = [8, 128], strides = [1, 1]} : vector<8x512xf32> to vector<8x128xf32>
    %cst_5 = arith.constant dense<0.000000e+00> : vector<8x8xf32>
    %9 = tpu.matmul %6, %7, %cst_5 {dimension_numbers = #tpu.dot_dimension_numbers<[1], [1], [0], [0], [0, 0, 1, 0], [], []>} : vector<8x128xf32>, vector<8x128xf32>, vector<8x8xf32> -> vector<8x8xf32>
    %cst_6 = arith.constant dense<0xFF800000> : vector<8xf32>
    %10 = vector.multi_reduction <maximumf>, %9, %cst_6 [1] : vector<8x8xf32> to vector<8xf32>
    %11 = vector.shape_cast %10 : vector<8xf32> to vector<8x1xf32>
    %12 = vector.broadcast %11 : vector<8x1xf32> to vector<8x8xf32>
    %13 = arith.subf %9, %12 : vector<8x8xf32>
    %14 = math.exp %13 : vector<8x8xf32>
    %cst_7 = arith.constant dense<0.000000e+00> : vector<8xf32>
    %15 = vector.multi_reduction <add>, %14, %cst_7 [1] : vector<8x8xf32> to vector<8xf32>
    %16 = vector.shape_cast %15 : vector<8xf32> to vector<8x1xf32>
    %cst_8 = arith.constant dense<0.000000e+00> : vector<8x128xf32>
    %17 = tpu.matmul %14, %8, %cst_8 {dimension_numbers = #tpu.dot_dimension_numbers<[1], [0], [0], [1], [0, 0, 1, 1], [], []>} : vector<8x8xf32>, vector<8x128xf32>, vector<8x128xf32> -> vector<8x128xf32>
    %18 = vector.extract_strided_slice %5 {offsets = [0, 384], sizes = [8, 128], strides = [1, 1]} : vector<8x512xf32> to vector<8x128xf32>
    %cst_9 = arith.constant 0.000000e+00 : f32
    %19 = vector.broadcast %cst_9 : f32 to vector<8x128xf32>
    %20 = arith.maximumf %17, %19 : vector<8x128xf32>
    %21 = tpu.reciprocal %16 : vector<8x1xf32> -> vector<8x1xf32>
    %22 = vector.broadcast %21 : vector<8x1xf32> to vector<8x128xf32>
    %23 = arith.mulf %20, %22 : vector<8x128xf32>
    %24 = arith.addf %23, %18 : vector<8x128xf32>
    %c0_10 = arith.constant 0 : index
    %c0_11 = arith.constant 0 : index
    %25 = vector.load %arg5[%c0_10, %c0_11] : memref<8x128xf32, #tpu.memory_space<vmem>>, vector<8x128xf32>
    tpu.vector_store %arg5[%c0_10, %c0_11], %24 {strides = array<i32>} : memref<8x128xf32, #tpu.memory_space<vmem>>, vector<8x128xf32>,
    %c0_i32 = arith.constant 0 : i32
    %c0_12 = arith.constant 0 : index
    %c0_13 = arith.constant 0 : index
    %26 = vector.load %arg5[%c0_12, %c0_13] : memref<8x128xf32, #tpu.memory_space<vmem>>, vector<8x128xf32>
    %27 = arith.index_cast %c0_i32 : i32 to index
    %c0_14 = arith.constant 0 : index
    %c0_15 = arith.constant 0 : index
    %28 = vector.load %arg3[%27, %c0_14, %c0_15] : memref<1x128x384xf32, #tpu.memory_space<vmem>>, vector<1x128x384xf32>
    %29 = vector.shape_cast %28 : vector<1x128x384xf32> to vector<128x384xf32>
    %30 = arith.index_cast %c0_i32 : i32 to index
    %c0_16 = arith.constant 0 : index
    %c0_17 = arith.constant 0 : index
    %31 = vector.load %arg4[%30, %c0_16, %c0_17] : memref<1x1x384xf32, #tpu.memory_space<vmem>>, vector<1x1x384xf32>
    %32 = vector.shape_cast %31 : vector<1x1x384xf32> to vector<1x384xf32>
    %cst_18 = arith.constant dense<0.000000e+00> : vector<8x384xf32>
    %33 = tpu.matmul %26, %29, %cst_18 {dimension_numbers = #tpu.dot_dimension_numbers<[1], [0], [0], [1], [0, 0, 1, 1], [], []>} : vector<8x128xf32>, vector<128x384xf32>, vector<8x384xf32> -> vector<8x384xf32>
    %34 = vector.broadcast %32 : vector<1x384xf32> to vector<8x384xf32>
    %35 = arith.addf %33, %34 : vector<8x384xf32>
    %36 = vector.extract_strided_slice %35 {offsets = [0, 0], sizes = [8, 128], strides = [1, 1]} : vector<8x384xf32> to vector<8x128xf32>
    %37 = vector.extract_strided_slice %35 {offsets = [0, 128], sizes = [8, 128], strides = [1, 1]} : vector<8x384xf32> to vector<8x128xf32>
    %38 = vector.extract_strided_slice %35 {offsets = [0, 256], sizes = [8, 128], strides = [1, 1]} : vector<8x384xf32> to vector<8x128xf32>
    %cst_19 = arith.constant dense<0.000000e+00> : vector<8x8xf32>
    %39 = tpu.matmul %36, %37, %cst_19 {dimension_numbers = #tpu.dot_dimension_numbers<[1], [1], [0], [0], [0, 0, 1, 0], [], []>} : vector<8x128xf32>, vector<8x128xf32>, vector<8x8xf32> -> vector<8x8xf32>
    %cst_20 = arith.constant dense<0xFF800000> : vector<8xf32>
    %40 = vector.multi_reduction <maximumf>, %39, %cst_20 [1] : vector<8x8xf32> to vector<8xf32>
    %41 = vector.shape_cast %40 : vector<8xf32> to vector<8x1xf32>
    %42 = vector.broadcast %41 : vector<8x1xf32> to vector<8x8xf32>
    %43 = arith.subf %39, %42 : vector<8x8xf32>
    %44 = math.exp %43 : vector<8x8xf32>
    %cst_21 = arith.constant dense<0.000000e+00> : vector<8xf32>
    %45 = vector.multi_reduction <add>, %44, %cst_21 [1] : vector<8x8xf32> to vector<8xf32>
    %46 = vector.shape_cast %45 : vector<8xf32> to vector<8x1xf32>
    %cst_22 = arith.constant dense<0.000000e+00> : vector<8x128xf32>
    %47 = tpu.matmul %44, %38, %cst_22 {dimension_numbers = #tpu.dot_dimension_numbers<[1], [0], [0], [1], [0, 0, 1, 1], [], []>} : vector<8x8xf32>, vector<8x128xf32>, vector<8x128xf32> -> vector<8x128xf32>
    %c0_23 = arith.constant 0 : index
    %c0_24 = arith.constant 0 : index
    %48 = vector.load %arg5[%c0_23, %c0_24] : memref<8x128xf32, #tpu.memory_space<vmem>>, vector<8x128xf32>
    %cst_25 = arith.constant 0.000000e+00 : f32
    %49 = vector.broadcast %cst_25 : f32 to vector<8x128xf32>
    %50 = arith.maximumf %47, %49 : vector<8x128xf32>
    %51 = tpu.reciprocal %46 : vector<8x1xf32> -> vector<8x1xf32>
    %52 = vector.broadcast %51 : vector<8x1xf32> to vector<8x128xf32>
    %53 = arith.mulf %50, %52 : vector<8x128xf32>
    %54 = arith.addf %53, %48 : vector<8x128xf32>
    %c0_26 = arith.constant 0 : index
    %c0_27 = arith.constant 0 : index
    %55 = vector.load %arg5[%c0_26, %c0_27] : memref<8x128xf32, #tpu.memory_space<vmem>>, vector<8x128xf32>
    tpu.vector_store %arg5[%c0_26, %c0_27], %54 {strides = array<i32>} : memref<8x128xf32, #tpu.memory_space<vmem>>, vector<8x128xf32>,
    %c1_i32 = arith.constant 1 : i32
    return
  }
}

</mosaic_0001>

<llo_original>
// kernel: tpu_custom_call.1
$region0: #{tpu_custom_call.1}
  #allocation0 [shape = 'u32[]', space=smem, size = 0x4, offset = 0x4, fixed_abs, tag = 'smem constant byte address 0x4 - core index']
  #allocation1 [shape = 'u32[144,128]{1,0:T(1,128)}', space=vmem, size = 0x12000, scoped, tag = 'internal scratch']
  %s0 = inlined_call_operand.hbm [shape: f32[8,32], index: 0, kind: input, shape index: {}]
  %s1 = inlined_call_operand.hbm [shape: f32[32,512], index: 1, kind: input, shape index: {}]
  %s2 = inlined_call_operand.vmem [shape: f32[1,512], index: 2, kind: input, shape index: {}]
  %s3 = inlined_call_operand.hbm [shape: f32[1,128,384], index: 3, kind: input, shape index: {}]
  %s4 = inlined_call_operand.vmem [shape: f32[1,1,384], index: 4, kind: input, shape index: {}]
  %s5 = inlined_call_operand.hbm [shape: f32[8,128], index: 5, kind: output, shape index: {}]
  %s6 = sld [smem:[#allocation0]]
  $region42: #{tpu_custom_call.1} parent=0
    _
  %s8 = ssub.s32 1, %s6
  %s9 = scalar_select 0, %s8, %s6
  $region1: #{tpu_custom_call.1} parent=0
    #allocation2 [shape = 'u8[4096]{0}', space=vmem, size = 0x1000, scoped, tag = 'input window, operand 0, single buffered']
    #allocation3 [shape = 's32[1]{0}', space=sflag, size = 0x4, scoped, tag = 'scoped memory for tpu_custom_call.1']
    #allocation4 [shape = 's32[1]{0}', space=sflag, size = 0x4, scoped, tag = 'scoped memory for tpu_custom_call.1']
    #allocation5 [shape = 'u8[65536]{0}', space=vmem, size = 0x10000, scoped, tag = 'input window, operand 1, single buffered']
    #allocation6 [shape = 's32[1]{0}', space=sflag, size = 0x4, scoped, tag = 'scoped memory for tpu_custom_call.1']
    #allocation7 [shape = 'u8[196608]{0}', space=vmem, size = 0x30000, scoped, tag = 'input window, operand 3, single buffered']
    #allocation8 [shape = 'u8[4096]{0}', space=vmem, size = 0x1000, scoped, tag = 'output window, operand 0, single buffered']
    %10 = vsyncpa [#allocation3], 0
    %11 = vsyncpa [#allocation6], 0
    %12 = vsyncpa [#allocation4], 0
    // Predicated region
    $region2: #{tpu_custom_call.1} parent=1 // pred_check
      _
    $region3: #{tpu_custom_call.1} parent=1 // pred_check_branch
      %14 = sbr.rel (0) target = $region5
    $region4: #{tpu_custom_call.1} parent=1 // pred_region
      %s16 = ssub.s32 128, 128
      %17 = vsyncadd [#allocation3], %s16
      %s19 = sshll.u32 [#allocation2], 4
      %s20 = int_to_ptr.vmem [resolvable:$true] %s19
      %22 = dma.hbm_to_vmem [thread:$0]  %s0, 128, %s20, [#allocation3]
    $region5: #{tpu_custom_call.1} parent=1 // pred_fallthru
      _
    // Predicated region
    $region6: #{tpu_custom_call.1} parent=1 // pred_check
      _
    $region7: #{tpu_custom_call.1} parent=1 // pred_check_branch
      %24 = sbr.rel (0) target = $region9
    $region8: #{tpu_custom_call.1} parent=1 // pred_region
      %s26 = ssub.s32 2048, 2048
      %27 = vsyncadd [#allocation6], %s26
      %s28 = sshll.u32 [#allocation5], 4
      %s29 = int_to_ptr.vmem [resolvable:$true] %s28
      %34 = dma.hbm_to_vmem [thread:$0]  %s1, 2048, %s29, [#allocation6], 512, 512, 32
    $region9: #{tpu_custom_call.1} parent=1 // pred_fallthru
      _
    // Predicated region
    $region10: #{tpu_custom_call.1} parent=1 // pred_check
      _
    $region11: #{tpu_custom_call.1} parent=1 // pred_check_branch
      %36 = sbr.rel (0) target = $region13
    $region12: #{tpu_custom_call.1} parent=1 // pred_region
      _
    $region13: #{tpu_custom_call.1} parent=1 // pred_fallthru
      _
    // Predicated region
    $region14: #{tpu_custom_call.1} parent=1 // pred_check
      _
    $region15: #{tpu_custom_call.1} parent=1 // pred_check_branch
      %38 = sbr.rel (0) target = $region17
    $region16: #{tpu_custom_call.1} parent=1 // pred_region
      %s40 = ssub.s32 6144, 6144
      %41 = vsyncadd [#allocation6], %s40
      %s42 = sshll.u32 [#allocation7], 4
      %s43 = int_to_ptr.vmem [resolvable:$true] %s42
      %48 = dma.hbm_to_vmem [thread:$0]  %s3, 6144, %s43, [#allocation6], 384, 384, 24
    $region17: #{tpu_custom_call.1} parent=1 // pred_fallthru
      _
    // Predicated region
    $region18: #{tpu_custom_call.1} parent=1 // pred_check
      _
    $region19: #{tpu_custom_call.1} parent=1 // pred_check_branch
      %50 = sbr.rel (0) target = $region21
    $region20: #{tpu_custom_call.1} parent=1 // pred_region
      _
    $region21: #{tpu_custom_call.1} parent=1 // pred_fallthru
      _
    // Predicated region
    $region22: #{tpu_custom_call.1} parent=1 // pred_check
      _
    $region23: #{tpu_custom_call.1} parent=1 // pred_check_branch
      %52 = sbr.rel (0) target = $region25
    $region24: #{tpu_custom_call.1} parent=1 // pred_region
      %53 = dma.done [#allocation3], 128
    $region25: #{tpu_custom_call.1} parent=1 // pred_fallthru
      _
    // Predicated region
    $region26: #{tpu_custom_call.1} parent=1 // pred_check
      _
    $region27: #{tpu_custom_call.1} parent=1 // pred_check_branch
      %55 = sbr.rel (0) target = $region29
    $region28: #{tpu_custom_call.1} parent=1 // pred_region
      %56 = dma.done [#allocation6], 2048
    $region29: #{tpu_custom_call.1} parent=1 // pred_fallthru
      _
    // Predicated region
    $region30: #{tpu_custom_call.1} parent=1 // pred_check
      _
    $region31: #{tpu_custom_call.1} parent=1 // pred_check_branch
      %58 = sbr.rel (0) target = $region33
    $region32: #{tpu_custom_call.1} parent=1 // pred_region
      %59 = dma.done [#allocation6], 6144
    $region33: #{tpu_custom_call.1} parent=1 // pred_fallthru
      _
    %v60 = vld [vmem:[#allocation2] sm:$0xff]
    %v61 = vld [vmem:[#allocation5] sm:$0xff]
    %v62 = vld [vmem:[#allocation5 + $0x8] sm:$0xff]
    %v63 = vld [vmem:[#allocation5 + $0x10] sm:$0xff]
    %v64 = vld [vmem:[#allocation5 + $0x18] sm:$0xff]
    %v65 = vld [vmem:[#allocation5 + $0x20] sm:$0xff]
    %v66 = vld [vmem:[#allocation5 + $0x28] sm:$0xff]
    %v67 = vld [vmem:[#allocation5 + $0x30] sm:$0xff]
    %v68 = vld [vmem:[#allocation5 + $0x38] sm:$0xff]
    %v69 = vld [vmem:[#allocation5 + $0x40] sm:$0xff]
    %v70 = vld [vmem:[#allocation5 + $0x48] sm:$0xff]
    %v71 = vld [vmem:[#allocation5 + $0x50] sm:$0xff]
    %v72 = vld [vmem:[#allocation5 + $0x58] sm:$0xff]
    %v73 = vld [vmem:[#allocation5 + $0x60] sm:$0xff]
    %v74 = vld [vmem:[#allocation5 + $0x68] sm:$0xff]
    %v75 = vld [vmem:[#allocation5 + $0x70] sm:$0xff]
    %v76 = vld [vmem:[#allocation5 + $0x78] sm:$0xff]
    %v77 = vld [vmem:[%s2] sm:$0xf]
    %v79 = vlaneseq
    %v80 = vshrl.u32 %v79, 7
    %v81 = vsub.s32 0, %v80
    %v82 = vrot.slane %v77, %v81
    %v83 = vlaneseq
    %v84 = vshrl.u32 %v83, 7
    %v85 = vsub.s32 1, %v84
    %v86 = vrot.slane %v77, %v85
    %v87 = vlaneseq
    %v88 = vshrl.u32 %v87, 7
    %v89 = vsub.s32 2, %v88
    %v90 = vrot.slane %v77, %v89
    %v91 = vlaneseq
    %v92 = vshrl.u32 %v91, 7
    %v93 = vsub.s32 3, %v92
    %v94 = vrot.slane %v77, %v93
    %vm99 = vcmask 261120
    %v101 = vsel %vm99, %v60, 0
    %103 = vmatprep.subr.mxu0 %v62
    %104 = vmatpush1.msra.mxu0 %v61
    %105 = vmatprep.subr.mxu0 %v66
    %106 = vmatpush1.msra.mxu0 %v65
    %107 = vmatprep.subr.mxu0 %v70
    %108 = vmatpush1.msra.mxu0 %v69
    %109 = vmatprep.subr.mxu0 %v74
    %110 = vmatpush1.msra.mxu0 %v73
    %111 = vmatprep.subr.mxu0 0.0
    %112 = vmatpush1.msra.mxu0 0.0
    %113 = vmatprep.subr.mxu0 0.0
    %114 = vmatpush1.msra.mxu0 0.0
    %115 = vmatprep.subr.mxu0 0.0
    %116 = vmatpush1.msra.mxu0 0.0
    %117 = vmatprep.subr.mxu0 0.0
    %118 = vmatpush1.msra.mxu0 0.0
    %119 = vmatprep.subr.mxu0 0.0
    %120 = vmatpush1.msra.mxu0 0.0
    %121 = vmatprep.subr.mxu0 0.0
    %122 = vmatpush1.msra.mxu0 0.0
    %123 = vmatprep.subr.mxu0 0.0
    %124 = vmatpush1.msra.mxu0 0.0
    %125 = vmatprep.subr.mxu0 0.0
    %126 = vmatpush1.msra.mxu0 0.0
    %127 = vmatprep.subr.mxu0 0.0
    %128 = vmatpush1.msra.mxu0 0.0
    %129 = vmatprep.subr.mxu0 0.0
    %130 = vmatpush1.msra.mxu0 0.0
    %131 = vmatprep.subr.mxu0 0.0
    %132 = vmatpush1.msra.mxu0 0.0
    %133 = vmatprep.subr.mxu0 0.0
    %134 = vmatpush1.msra.mxu0 0.0
    %135 = vmatprep.subr.mxu0 0.0
    %136 = vmatpush1.msra.mxu0 0.0
    %137 = vmatprep.subr.mxu0 0.0
    %138 = vmatpush1.msra.mxu0 0.0
    %139 = vmatprep.subr.mxu0 0.0
    %140 = vmatpush1.msra.mxu0 0.0
    %141 = vmatprep.subr.mxu0 0.0
    %142 = vmatpush1.msra.mxu0 0.0
    %143 = vmatprep.subr.mxu0 0.0
    %144 = vmatpush1.msra.mxu0 0.0
    %145 = vmatprep.subr.mxu0 0.0
    %146 = vmatpush1.msra.mxu0 0.0
    %147 = vmatprep.subr.mxu0 0.0
    %148 = vmatpush1.msra.mxu0 0.0
    %149 = vmatprep.subr.mxu0 0.0
    %150 = vmatpush1.msra.mxu0 0.0
    %151 = vmatprep.subr.mxu0 0.0
    %152 = vmatpush1.msra.mxu0 0.0
    %153 = vmatprep.subr.mxu0 0.0
    %154 = vmatpush1.msra.mxu0 0.0
    %155 = vmatprep.subr.mxu0 0.0
    %156 = vmatpush1.msra.mxu0 0.0
    %157 = vmatprep.subr.mxu0 0.0
    %158 = vmatpush1.msra.mxu0 0.0
    %159 = vmatprep.subr.mxu0 0.0
    %160 = vmatpush1.msra.mxu0 0.0
    %161 = vmatprep.subr.mxu0 0.0
    %162 = vmatpush1.msra.mxu0 0.0
    %163 = vmatprep.subr.mxu0 0.0
    %164 = vmatpush1.msra.mxu0 0.0
    %165 = vmatprep.subr.mxu0 0.0
    %166 = vmatpush1.msra.mxu0 0.0
    %167 = vmatprep.mubr.f32.mxu0 0.0
    %168 = vmatmul.mubr.f32.gmra.mrb[0].mxu0 %v101
    %v169 = vpop.f32.mrb[0].mxu0
    %v170 = vadd.f32 %v82, %v169
    %v171 = vpop.f32.mrb[0].mxu0
    %v172 = vadd.f32 %v86, %v171
    %173 = vdwg.mxu0
    %174 = vmatprep.subr.mxu0 %v64
    %175 = vmatpush1.msra.mxu0 %v63
    %176 = vmatprep.subr.mxu0 %v68
    %177 = vmatpush1.msra.mxu0 %v67
    %178 = vmatprep.subr.mxu0 %v72
    %179 = vmatpush1.msra.mxu0 %v71
    %180 = vmatprep.subr.mxu0 %v76
    %181 = vmatpush1.msra.mxu0 %v75
    %182 = vmatprep.subr.mxu0 0.0
    %183 = vmatpush1.msra.mxu0 0.0
    %184 = vmatprep.subr.mxu0 0.0
    %185 = vmatpush1.msra.mxu0 0.0
    %186 = vmatprep.subr.mxu0 0.0
    %187 = vmatpush1.msra.mxu0 0.0
    %188 = vmatprep.subr.mxu0 0.0
    %189 = vmatpush1.msra.mxu0 0.0
    %190 = vmatprep.subr.mxu0 0.0
    %191 = vmatpush1.msra.mxu0 0.0
    %192 = vmatprep.subr.mxu0 0.0
    %193 = vmatpush1.msra.mxu0 0.0
    %194 = vmatprep.subr.mxu0 0.0
    %195 = vmatpush1.msra.mxu0 0.0
    %196 = vmatprep.subr.mxu0 0.0
    %197 = vmatpush1.msra.mxu0 0.0
    %198 = vmatprep.subr.mxu0 0.0
    %199 = vmatpush1.msra.mxu0 0.0
    %200 = vmatprep.subr.mxu0 0.0
    %201 = vmatpush1.msra.mxu0 0.0
    %202 = vmatprep.subr.mxu0 0.0
    %203 = vmatpush1.msra.mxu0 0.0
    %204 = vmatprep.subr.mxu0 0.0
    %205 = vmatpush1.msra.mxu0 0.0
    %206 = vmatprep.subr.mxu0 0.0
    %207 = vmatpush1.msra.mxu0 0.0
    %208 = vmatprep.subr.mxu0 0.0
    %209 = vmatpush1.msra.mxu0 0.0
    %210 = vmatprep.subr.mxu0 0.0
    %211 = vmatpush1.msra.mxu0 0.0
    %212 = vmatprep.subr.mxu0 0.0
    %213 = vmatpush1.msra.mxu0 0.0
    %214 = vmatprep.subr.mxu0 0.0
    %215 = vmatpush1.msra.mxu0 0.0
    %216 = vmatprep.subr.mxu0 0.0
    %217 = vmatpush1.msra.mxu0 0.0
    %218 = vmatprep.subr.mxu0 0.0
    %219 = vmatpush1.msra.mxu0 0.0
    %220 = vmatprep.subr.mxu0 0.0
    %221 = vmatpush1.msra.mxu0 0.0
    %222 = vmatprep.subr.mxu0 0.0
    %223 = vmatpush1.msra.mxu0 0.0
    %224 = vmatprep.subr.mxu0 0.0
    %225 = vmatpush1.msra.mxu0 0.0
    %226 = vmatprep.subr.mxu0 0.0
    %227 = vmatpush1.msra.mxu0 0.0
    %228 = vmatprep.subr.mxu0 0.0
    %229 = vmatpush1.msra.mxu0 0.0
    %230 = vmatprep.subr.mxu0 0.0
    %231 = vmatpush1.msra.mxu0 0.0
    %232 = vmatprep.subr.mxu0 0.0
    %233 = vmatpush1.msra.mxu0 0.0
    %234 = vmatprep.subr.mxu0 0.0
    %235 = vmatpush1.msra.mxu0 0.0
    %236 = vmatprep.subr.mxu0 0.0
    %237 = vmatpush1.msra.mxu0 0.0
    %238 = vmatprep.mubr.f32.mxu0 0.0
    %239 = vmatmul.mubr.f32.gmra.mrb[0].mxu0 %v101
    %v240 = vpop.f32.mrb[0].mxu0
    %v241 = vadd.f32 %v90, %v240
    %v242 = vpop.f32.mrb[0].mxu0
    %v243 = vadd.f32 %v94, %v242
    %244 = vdwg.mxu0
    %245 = vmatprep.subr.mxu0 0.0
    %246 = vmatpush1.xpose.msra.mxu0 %v172
    %247 = vmatprep.subr.mxu0 0.0
    %248 = vmatpush1.xpose.msra.mxu0 0.0
    %249 = vmatprep.subr.mxu0 0.0
    %250 = vmatpush1.xpose.msra.mxu0 0.0
    %251 = vmatprep.subr.mxu0 0.0
    %252 = vmatpush1.xpose.msra.mxu0 0.0
    %253 = vmatprep.subr.mxu0 0.0
    %254 = vmatpush1.xpose.msra.mxu0 0.0
    %255 = vmatprep.subr.mxu0 0.0
    %256 = vmatpush1.xpose.msra.mxu0 0.0
    %257 = vmatprep.subr.mxu0 0.0
    %258 = vmatpush1.xpose.msra.mxu0 0.0
    %259 = vmatprep.subr.mxu0 0.0
    %260 = vmatpush1.xpose.msra.mxu0 0.0
    %261 = vmatprep.subr.mxu0 0.0
    %262 = vmatpush1.xpose.msra.mxu0 0.0
    %263 = vmatprep.subr.mxu0 0.0
    %264 = vmatpush1.xpose.msra.mxu0 0.0
    %265 = vmatprep.subr.mxu0 0.0
    %266 = vmatpush1.xpose.msra.mxu0 0.0
    %267 = vmatprep.subr.mxu0 0.0
    %268 = vmatpush1.xpose.msra.mxu0 0.0
    %269 = vmatprep.subr.mxu0 0.0
    %270 = vmatpush1.xpose.msra.mxu0 0.0
    %271 = vmatprep.subr.mxu0 0.0
    %272 = vmatpush1.xpose.msra.mxu0 0.0
    %273 = vmatprep.subr.mxu0 0.0
    %274 = vmatpush1.xpose.msra.mxu0 0.0
    %275 = vmatprep.subr.mxu0 0.0
    %276 = vmatpush1.xpose.msra.mxu0 0.0
    %277 = vmatprep.subr.mxu0 0.0
    %278 = vmatpush1.xpose.msra.mxu0 0.0
    %279 = vmatprep.subr.mxu0 0.0
    %280 = vmatpush1.xpose.msra.mxu0 0.0
    %281 = vmatprep.subr.mxu0 0.0
    %282 = vmatpush1.xpose.msra.mxu0 0.0
    %283 = vmatprep.subr.mxu0 0.0
    %284 = vmatpush1.xpose.msra.mxu0 0.0
    %285 = vmatprep.subr.mxu0 0.0
    %286 = vmatpush1.xpose.msra.mxu0 0.0
    %287 = vmatprep.subr.mxu0 0.0
    %288 = vmatpush1.xpose.msra.mxu0 0.0
    %289 = vmatprep.subr.mxu0 0.0
    %290 = vmatpush1.xpose.msra.mxu0 0.0
    %291 = vmatprep.subr.mxu0 0.0
    %292 = vmatpush1.xpose.msra.mxu0 0.0
    %293 = vmatprep.subr.mxu0 0.0
    %294 = vmatpush1.xpose.msra.mxu0 0.0
    %295 = vmatprep.subr.mxu0 0.0
    %296 = vmatpush1.xpose.msra.mxu0 0.0
    %297 = vmatprep.subr.mxu0 0.0
    %298 = vmatpush1.xpose.msra.mxu0 0.0
    %299 = vmatprep.subr.mxu0 0.0
    %300 = vmatpush1.xpose.msra.mxu0 0.0
    %301 = vmatprep.subr.mxu0 0.0
    %302 = vmatpush1.xpose.msra.mxu0 0.0
    %303 = vmatprep.subr.mxu0 0.0
    %304 = vmatpush1.xpose.msra.mxu0 0.0
    %305 = vmatprep.subr.mxu0 0.0
    %306 = vmatpush1.xpose.msra.mxu0 0.0
    %307 = vmatprep.subr.mxu0 0.0
    %308 = vmatpush1.xpose.msra.mxu0 0.0
    %309 = vmatprep.mubr.f32.mxu0 0.0
    %310 = vmatmul.mubr.f32.gmra.mrb[0].mxu0 %v170
    %v311 = vpop.f32.mrb[0].mxu0
    %v312 = vadd.f32 0.0, %v311
    %v313 = vpop.f32.mrb[0].mxu0
    %314 = vdwg.mxu0
    %vm315 = vcmask 64512
    %v316 = vsel %vm315, %v312, -inf
    %317 = vmax.xlane.f32.xlu0 %v316
    %v318 = vpop.xlane.xlu0 %317
    %v319 = vsub.f32 %v312, %v318
    %v320 = vmul.f32 %v319, 1.442695
    %v321 = vpow.pop %v320
    %v322 = vsel %vm315, %v321, 0.0
    %323 = vadd.xlane.f32.xlu0 %v322
    %v324 = vpop.xlane.xlu0 %323
    %v326 = vsel %vm315, %v321, 0
    %328 = vmatprep.subr.mxu0 0.0
    %329 = vmatpush1.msra.mxu0 %v241
    %330 = vmatprep.subr.mxu0 0.0
    %331 = vmatpush1.msra.mxu0 0.0
    %332 = vmatprep.subr.mxu0 0.0
    %333 = vmatpush1.msra.mxu0 0.0
    %334 = vmatprep.subr.mxu0 0.0
    %335 = vmatpush1.msra.mxu0 0.0
    %336 = vmatprep.subr.mxu0 0.0
    %337 = vmatpush1.msra.mxu0 0.0
    %338 = vmatprep.subr.mxu0 0.0
    %339 = vmatpush1.msra.mxu0 0.0
    %340 = vmatprep.subr.mxu0 0.0
    %341 = vmatpush1.msra.mxu0 0.0
    %342 = vmatprep.subr.mxu0 0.0
    %343 = vmatpush1.msra.mxu0 0.0
    %344 = vmatprep.subr.mxu0 0.0
    %345 = vmatpush1.msra.mxu0 0.0
    %346 = vmatprep.subr.mxu0 0.0
    %347 = vmatpush1.msra.mxu0 0.0
    %348 = vmatprep.subr.mxu0 0.0
    %349 = vmatpush1.msra.mxu0 0.0
    %350 = vmatprep.subr.mxu0 0.0
    %351 = vmatpush1.msra.mxu0 0.0
    %352 = vmatprep.subr.mxu0 0.0
    %353 = vmatpush1.msra.mxu0 0.0
    %354 = vmatprep.subr.mxu0 0.0
    %355 = vmatpush1.msra.mxu0 0.0
    %356 = vmatprep.subr.mxu0 0.0
    %357 = vmatpush1.msra.mxu0 0.0
    %358 = vmatprep.subr.mxu0 0.0
    %359 = vmatpush1.msra.mxu0 0.0
    %360 = vmatprep.subr.mxu0 0.0
    %361 = vmatpush1.msra.mxu0 0.0
    %362 = vmatprep.subr.mxu0 0.0
    %363 = vmatpush1.msra.mxu0 0.0
    %364 = vmatprep.subr.mxu0 0.0
    %365 = vmatpush1.msra.mxu0 0.0
    %366 = vmatprep.subr.mxu0 0.0
    %367 = vmatpush1.msra.mxu0 0.0
    %368 = vmatprep.subr.mxu0 0.0
    %369 = vmatpush1.msra.mxu0 0.0
    %370 = vmatprep.subr.mxu0 0.0
    %371 = vmatpush1.msra.mxu0 0.0
    %372 = vmatprep.subr.mxu0 0.0
    %373 = vmatpush1.msra.mxu0 0.0
    %374 = vmatprep.subr.mxu0 0.0
    %375 = vmatpush1.msra.mxu0 0.0
    %376 = vmatprep.subr.mxu0 0.0
    %377 = vmatpush1.msra.mxu0 0.0
    %378 = vmatprep.subr.mxu0 0.0
    %379 = vmatpush1.msra.mxu0 0.0
    %380 = vmatprep.subr.mxu0 0.0
    %381 = vmatpush1.msra.mxu0 0.0
    %382 = vmatprep.subr.mxu0 0.0
    %383 = vmatpush1.msra.mxu0 0.0
    %384 = vmatprep.subr.mxu0 0.0
    %385 = vmatpush1.msra.mxu0 0.0
    %386 = vmatprep.subr.mxu0 0.0
    %387 = vmatpush1.msra.mxu0 0.0
    %388 = vmatprep.subr.mxu0 0.0
    %389 = vmatpush1.msra.mxu0 0.0
    %390 = vmatprep.subr.mxu0 0.0
    %391 = vmatpush1.msra.mxu0 0.0
    %392 = vmatprep.mubr.f32.mxu0 0.0
    %393 = vmatmul.mubr.f32.gmra.mrb[0].mxu0 %v326
    %v394 = vpop.f32.mrb[0].mxu0
    %v395 = vadd.f32 0.0, %v394
    %v396 = vpop.f32.mrb[0].mxu0
    %397 = vdwg.mxu0
    %v398 = vmax.f32 %v395, 0.0
    %v399 = vrcp.pop %v324
    %v400 = vmul.f32 %v398, %v399
    %v401 = vadd.f32 %v400, %v243
    %402 = vst [vmem:[#allocation8] sm:$0xff] %v401
    %v403 = vld [vmem:[#allocation8] sm:$0xff]
    %v404 = vld [vmem:[#allocation7] sm:$0xff]
    %v405 = vld [vmem:[#allocation7 + $0x8] sm:$0xff]
    %v406 = vld [vmem:[#allocation7 + $0x10] sm:$0xff]
    %v407 = vld [vmem:[#allocation7 + $0x18] sm:$0xff]
    %v408 = vld [vmem:[#allocation7 + $0x20] sm:$0xff]
    %v409 = vld [vmem:[#allocation7 + $0x28] sm:$0xff]
    %v410 = vld [vmem:[#allocation7 + $0x30] sm:$0xff]
    %v411 = vld [vmem:[#allocation7 + $0x38] sm:$0xff]
    %v412 = vld [vmem:[#allocation7 + $0x40] sm:$0xff]
    %v413 = vld [vmem:[#allocation7 + $0x48] sm:$0xff]
    %v414 = vld [vmem:[#allocation7 + $0x50] sm:$0xff]
    %v415 = vld [vmem:[#allocation7 + $0x58] sm:$0xff]
    %v416 = vld [vmem:[#allocation7 + $0x60] sm:$0xff]
    %v417 = vld [vmem:[#allocation7 + $0x68] sm:$0xff]
    %v418 = vld [vmem:[#allocation7 + $0x70] sm:$0xff]
    %v419 = vld [vmem:[#allocation7 + $0x78] sm:$0xff]
    %v420 = vld [vmem:[#allocation7 + $0x80] sm:$0xff]
    %v421 = vld [vmem:[#allocation7 + $0x88] sm:$0xff]
    %v422 = vld [vmem:[#allocation7 + $0x90] sm:$0xff]
    %v423 = vld [vmem:[#allocation7 + $0x98] sm:$0xff]
    %v424 = vld [vmem:[#allocation7 + $0xa0] sm:$0xff]
    %v425 = vld [vmem:[#allocation7 + $0xa8] sm:$0xff]
    %v426 = vld [vmem:[#allocation7 + $0xb0] sm:$0xff]
    %v427 = vld [vmem:[#allocation7 + $0xb8] sm:$0xff]
    %v428 = vld [vmem:[#allocation7 + $0xc0] sm:$0xff]
    %v429 = vld [vmem:[#allocation7 + $0xc8] sm:$0xff]
    %v430 = vld [vmem:[#allocation7 + $0xd0] sm:$0xff]
    %v431 = vld [vmem:[#allocation7 + $0xd8] sm:$0xff]
    %v432 = vld [vmem:[#allocation7 + $0xe0] sm:$0xff]
    %v433 = vld [vmem:[#allocation7 + $0xe8] sm:$0xff]
    %v434 = vld [vmem:[#allocation7 + $0xf0] sm:$0xff]
    %v435 = vld [vmem:[#allocation7 + $0xf8] sm:$0xff]
    %v436 = vld [vmem:[#allocation7 + $0x100] sm:$0xff]
    %v437 = vld [vmem:[#allocation7 + $0x108] sm:$0xff]
    %v438 = vld [vmem:[#allocation7 + $0x110] sm:$0xff]
    %v439 = vld [vmem:[#allocation7 + $0x118] sm:$0xff]
    %v440 = vld [vmem:[#allocation7 + $0x120] sm:$0xff]
    %v441 = vld [vmem:[#allocation7 + $0x128] sm:$0xff]
    %v442 = vld [vmem:[#allocation7 + $0x130] sm:$0xff]
    %v443 = vld [vmem:[#allocation7 + $0x138] sm:$0xff]
    %v444 = vld [vmem:[#allocation7 + $0x140] sm:$0xff]
    %v445 = vld [vmem:[#allocation7 + $0x148] sm:$0xff]
    %v446 = vld [vmem:[#allocation7 + $0x150] sm:$0xff]
    %v447 = vld [vmem:[#allocation7 + $0x158] sm:$0xff]
    %v448 = vld [vmem:[#allocation7 + $0x160] sm:$0xff]
    %v449 = vld [vmem:[#allocation7 + $0x168] sm:$0xff]
    %v450 = vld [vmem:[#allocation7 + $0x170] sm:$0xff]
    %v451 = vld [vmem:[#allocation7 + $0x178] sm:$0xff]
    %v452 = vld [vmem:[%s4] sm:$0x7]
    %v454 = vlaneseq
    %v455 = vshrl.u32 %v454, 7
    %v456 = vsub.s32 0, %v455
    %v457 = vrot.slane %v452, %v456
    %v458 = vlaneseq
    %v459 = vshrl.u32 %v458, 7
    %v460 = vsub.s32 1, %v459
    %v461 = vrot.slane %v452, %v460
    %v462 = vlaneseq
    %v463 = vshrl.u32 %v462, 7
    %v464 = vsub.s32 2, %v463
    %v465 = vrot.slane %v452, %v464
    %469 = vmatprep.subr.mxu0 %v405
    %470 = vmatpush1.msra.mxu0 %v404
    %471 = vmatprep.subr.mxu0 %v408
    %472 = vmatpush1.msra.mxu0 %v407
    %473 = vmatprep.subr.mxu0 %v411
    %474 = vmatpush1.msra.mxu0 %v410
    %475 = vmatprep.subr.mxu0 %v414
    %476 = vmatpush1.msra.mxu0 %v413
    %477 = vmatprep.subr.mxu0 %v417
    %478 = vmatpush1.msra.mxu0 %v416
    %479 = vmatprep.subr.mxu0 %v420
    %480 = vmatpush1.msra.mxu0 %v419
    %481 = vmatprep.subr.mxu0 %v423
    %482 = vmatpush1.msra.mxu0 %v422
    %483 = vmatprep.subr.mxu0 %v426
    %484 = vmatpush1.msra.mxu0 %v425
    %485 = vmatprep.subr.mxu0 %v429
    %486 = vmatpush1.msra.mxu0 %v428
    %487 = vmatprep.subr.mxu0 %v432
    %488 = vmatpush1.msra.mxu0 %v431
    %489 = vmatprep.subr.mxu0 %v435
    %490 = vmatpush1.msra.mxu0 %v434
    %491 = vmatprep.subr.mxu0 %v438
    %492 = vmatpush1.msra.mxu0 %v437
    %493 = vmatprep.subr.mxu0 %v441
    %494 = vmatpush1.msra.mxu0 %v440
    %495 = vmatprep.subr.mxu0 %v444
    %496 = vmatpush1.msra.mxu0 %v443
    %497 = vmatprep.subr.mxu0 %v447
    %498 = vmatpush1.msra.mxu0 %v446
    %499 = vmatprep.subr.mxu0 %v450
    %500 = vmatpush1.msra.mxu0 %v449
    %501 = vmatprep.subr.mxu0 0.0
    %502 = vmatpush1.msra.mxu0 0.0
    %503 = vmatprep.subr.mxu0 0.0
    %504 = vmatpush1.msra.mxu0 0.0
    %505 = vmatprep.subr.mxu0 0.0
    %506 = vmatpush1.msra.mxu0 0.0
    %507 = vmatprep.subr.mxu0 0.0
    %508 = vmatpush1.msra.mxu0 0.0
    %509 = vmatprep.subr.mxu0 0.0
    %510 = vmatpush1.msra.mxu0 0.0
    %511 = vmatprep.subr.mxu0 0.0
    %512 = vmatpush1.msra.mxu0 0.0
    %513 = vmatprep.subr.mxu0 0.0
    %514 = vmatpush1.msra.mxu0 0.0
    %515 = vmatprep.subr.mxu0 0.0
    %516 = vmatpush1.msra.mxu0 0.0
    %517 = vmatprep.subr.mxu0 0.0
    %518 = vmatpush1.msra.mxu0 0.0
    %519 = vmatprep.subr.mxu0 0.0
    %520 = vmatpush1.msra.mxu0 0.0
    %521 = vmatprep.subr.mxu0 0.0
    %522 = vmatpush1.msra.mxu0 0.0
    %523 = vmatprep.subr.mxu0 0.0
    %524 = vmatpush1.msra.mxu0 0.0
    %525 = vmatprep.subr.mxu0 0.0
    %526 = vmatpush1.msra.mxu0 0.0
    %527 = vmatprep.subr.mxu0 0.0
    %528 = vmatpush1.msra.mxu0 0.0
    %529 = vmatprep.subr.mxu0 0.0
    %530 = vmatpush1.msra.mxu0 0.0
    %531 = vmatprep.subr.mxu0 0.0
    %532 = vmatpush1.msra.mxu0 0.0
    %533 = vmatprep.mubr.f32.mxu0 0.0
    %534 = vmatmul.mubr.f32.gmra.mrb[0].mxu0 %v403
    %v535 = vpop.f32.mrb[0].mxu0
    %v536 = vadd.f32 %v457, %v535
    %v537 = vpop.f32.mrb[0].mxu0
    %v538 = vadd.f32 %v461, %v537
    %539 = vdwg.mxu0
    %540 = vmatprep.subr.mxu0 0.0
    %541 = vmatpush1.msra.mxu0 %v406
    %542 = vmatprep.subr.mxu0 0.0
    %543 = vmatpush1.msra.mxu0 %v409
    %544 = vmatprep.subr.mxu0 0.0
    %545 = vmatpush1.msra.mxu0 %v412
    %546 = vmatprep.subr.mxu0 0.0
    %547 = vmatpush1.msra.mxu0 %v415
    %548 = vmatprep.subr.mxu0 0.0
    %549 = vmatpush1.msra.mxu0 %v418
    %550 = vmatprep.subr.mxu0 0.0
    %551 = vmatpush1.msra.mxu0 %v421
    %552 = vmatprep.subr.mxu0 0.0
    %553 = vmatpush1.msra.mxu0 %v424
    %554 = vmatprep.subr.mxu0 0.0
    %555 = vmatpush1.msra.mxu0 %v427
    %556 = vmatprep.subr.mxu0 0.0
    %557 = vmatpush1.msra.mxu0 %v430
    %558 = vmatprep.subr.mxu0 0.0
    %559 = vmatpush1.msra.mxu0 %v433
    %560 = vmatprep.subr.mxu0 0.0
    %561 = vmatpush1.msra.mxu0 %v436
    %562 = vmatprep.subr.mxu0 0.0
    %563 = vmatpush1.msra.mxu0 %v439
    %564 = vmatprep.subr.mxu0 0.0
    %565 = vmatpush1.msra.mxu0 %v442
    %566 = vmatprep.subr.mxu0 0.0
    %567 = vmatpush1.msra.mxu0 %v445
    %568 = vmatprep.subr.mxu0 0.0
    %569 = vmatpush1.msra.mxu0 %v448
    %570 = vmatprep.subr.mxu0 0.0
    %571 = vmatpush1.msra.mxu0 %v451
    %572 = vmatprep.subr.mxu0 0.0
    %573 = vmatpush1.msra.mxu0 0.0
    %574 = vmatprep.subr.mxu0 0.0
    %575 = vmatpush1.msra.mxu0 0.0
    %576 = vmatprep.subr.mxu0 0.0
    %577 = vmatpush1.msra.mxu0 0.0
    %578 = vmatprep.subr.mxu0 0.0
    %579 = vmatpush1.msra.mxu0 0.0
    %580 = vmatprep.subr.mxu0 0.0
    %581 = vmatpush1.msra.mxu0 0.0
    %582 = vmatprep.subr.mxu0 0.0
    %583 = vmatpush1.msra.mxu0 0.0
    %584 = vmatprep.subr.mxu0 0.0
    %585 = vmatpush1.msra.mxu0 0.0
    %586 = vmatprep.subr.mxu0 0.0
    %587 = vmatpush1.msra.mxu0 0.0
    %588 = vmatprep.subr.mxu0 0.0
    %589 = vmatpush1.msra.mxu0 0.0
    %590 = vmatprep.subr.mxu0 0.0
    %591 = vmatpush1.msra.mxu0 0.0
    %592 = vmatprep.subr.mxu0 0.0
    %593 = vmatpush1.msra.mxu0 0.0
    %594 = vmatprep.subr.mxu0 0.0
    %595 = vmatpush1.msra.mxu0 0.0
    %596 = vmatprep.subr.mxu0 0.0
    %597 = vmatpush1.msra.mxu0 0.0
    %598 = vmatprep.subr.mxu0 0.0
    %599 = vmatpush1.msra.mxu0 0.0
    %600 = vmatprep.subr.mxu0 0.0
    %601 = vmatpush1.msra.mxu0 0.0
    %602 = vmatprep.subr.mxu0 0.0
    %603 = vmatpush1.msra.mxu0 0.0
    %604 = vmatprep.mubr.f32.mxu0 0.0
    %605 = vmatmul.mubr.f32.gmra.mrb[0].mxu0 %v403
    %v606 = vpop.f32.mrb[0].mxu0
    %v607 = vadd.f32 %v465, %v606
    %v608 = vpop.f32.mrb[0].mxu0
    %609 = vdwg.mxu0
    %610 = vmatprep.subr.mxu0 0.0
    %611 = vmatpush1.xpose.msra.mxu0 %v538
    %612 = vmatprep.subr.mxu0 0.0
    %613 = vmatpush1.xpose.msra.mxu0 0.0
    %614 = vmatprep.subr.mxu0 0.0
    %615 = vmatpush1.xpose.msra.mxu0 0.0
    %616 = vmatprep.subr.mxu0 0.0
    %617 = vmatpush1.xpose.msra.mxu0 0.0
    %618 = vmatprep.subr.mxu0 0.0
    %619 = vmatpush1.xpose.msra.mxu0 0.0
    %620 = vmatprep.subr.mxu0 0.0
    %621 = vmatpush1.xpose.msra.mxu0 0.0
    %622 = vmatprep.subr.mxu0 0.0
    %623 = vmatpush1.xpose.msra.mxu0 0.0
    %624 = vmatprep.subr.mxu0 0.0
    %625 = vmatpush1.xpose.msra.mxu0 0.0
    %626 = vmatprep.subr.mxu0 0.0
    %627 = vmatpush1.xpose.msra.mxu0 0.0
    %628 = vmatprep.subr.mxu0 0.0
    %629 = vmatpush1.xpose.msra.mxu0 0.0
    %630 = vmatprep.subr.mxu0 0.0
    %631 = vmatpush1.xpose.msra.mxu0 0.0
    %632 = vmatprep.subr.mxu0 0.0
    %633 = vmatpush1.xpose.msra.mxu0 0.0
    %634 = vmatprep.subr.mxu0 0.0
    %635 = vmatpush1.xpose.msra.mxu0 0.0
    %636 = vmatprep.subr.mxu0 0.0
    %637 = vmatpush1.xpose.msra.mxu0 0.0
    %638 = vmatprep.subr.mxu0 0.0
    %639 = vmatpush1.xpose.msra.mxu0 0.0
    %640 = vmatprep.subr.mxu0 0.0
    %641 = vmatpush1.xpose.msra.mxu0 0.0
    %642 = vmatprep.subr.mxu0 0.0
    %643 = vmatpush1.xpose.msra.mxu0 0.0
    %644 = vmatprep.subr.mxu0 0.0
    %645 = vmatpush1.xpose.msra.mxu0 0.0
    %646 = vmatprep.subr.mxu0 0.0
    %647 = vmatpush1.xpose.msra.mxu0 0.0
    %648 = vmatprep.subr.mxu0 0.0
    %649 = vmatpush1.xpose.msra.mxu0 0.0
    %650 = vmatprep.subr.mxu0 0.0
    %651 = vmatpush1.xpose.msra.mxu0 0.0
    %652 = vmatprep.subr.mxu0 0.0
    %653 = vmatpush1.xpose.msra.mxu0 0.0
    %654 = vmatprep.subr.mxu0 0.0
    %655 = vmatpush1.xpose.msra.mxu0 0.0
    %656 = vmatprep.subr.mxu0 0.0
    %657 = vmatpush1.xpose.msra.mxu0 0.0
    %658 = vmatprep.subr.mxu0 0.0
    %659 = vmatpush1.xpose.msra.mxu0 0.0
    %660 = vmatprep.subr.mxu0 0.0
    %661 = vmatpush1.xpose.msra.mxu0 0.0
    %662 = vmatprep.subr.mxu0 0.0
    %663 = vmatpush1.xpose.msra.mxu0 0.0
    %664 = vmatprep.subr.mxu0 0.0
    %665 = vmatpush1.xpose.msra.mxu0 0.0
    %666 = vmatprep.subr.mxu0 0.0
    %667 = vmatpush1.xpose.msra.mxu0 0.0
    %668 = vmatprep.subr.mxu0 0.0
    %669 = vmatpush1.xpose.msra.mxu0 0.0
    %670 = vmatprep.subr.mxu0 0.0
    %671 = vmatpush1.xpose.msra.mxu0 0.0
    %672 = vmatprep.subr.mxu0 0.0
    %673 = vmatpush1.xpose.msra.mxu0 0.0
    %674 = vmatprep.mubr.f32.mxu0 0.0
    %675 = vmatmul.mubr.f32.gmra.mrb[0].mxu0 %v536
    %v676 = vpop.f32.mrb[0].mxu0
    %v677 = vadd.f32 0.0, %v676
    %v678 = vpop.f32.mrb[0].mxu0
    %679 = vdwg.mxu0
    %v680 = vsel %vm315, %v677, -inf
    %681 = vmax.xlane.f32.xlu0 %v680
    %v682 = vpop.xlane.xlu0 %681
    %v683 = vsub.f32 %v677, %v682
    %v684 = vmul.f32 %v683, 1.442695
    %v685 = vpow.pop %v684
    %v686 = vsel %vm315, %v685, 0.0
    %687 = vadd.xlane.f32.xlu0 %v686
    %v688 = vpop.xlane.xlu0 %687
    %v690 = vsel %vm315, %v685, 0
    %692 = vmatprep.subr.mxu0 0.0
    %693 = vmatpush1.msra.mxu0 %v607
    %694 = vmatprep.subr.mxu0 0.0
    %695 = vmatpush1.msra.mxu0 0.0
    %696 = vmatprep.subr.mxu0 0.0
    %697 = vmatpush1.msra.mxu0 0.0
    %698 = vmatprep.subr.mxu0 0.0
    %699 = vmatpush1.msra.mxu0 0.0
    %700 = vmatprep.subr.mxu0 0.0
    %701 = vmatpush1.msra.mxu0 0.0
    %702 = vmatprep.subr.mxu0 0.0
    %703 = vmatpush1.msra.mxu0 0.0
    %704 = vmatprep.subr.mxu0 0.0
    %705 = vmatpush1.msra.mxu0 0.0
    %706 = vmatprep.subr.mxu0 0.0
    %707 = vmatpush1.msra.mxu0 0.0
    %708 = vmatprep.subr.mxu0 0.0
    %709 = vmatpush1.msra.mxu0 0.0
    %710 = vmatprep.subr.mxu0 0.0
    %711 = vmatpush1.msra.mxu0 0.0
    %712 = vmatprep.subr.mxu0 0.0
    %713 = vmatpush1.msra.mxu0 0.0
    %714 = vmatprep.subr.mxu0 0.0
    %715 = vmatpush1.msra.mxu0 0.0
    %716 = vmatprep.subr.mxu0 0.0
    %717 = vmatpush1.msra.mxu0 0.0
    %718 = vmatprep.subr.mxu0 0.0
    %719 = vmatpush1.msra.mxu0 0.0
    %720 = vmatprep.subr.mxu0 0.0
    %721 = vmatpush1.msra.mxu0 0.0
    %722 = vmatprep.subr.mxu0 0.0
    %723 = vmatpush1.msra.mxu0 0.0
    %724 = vmatprep.subr.mxu0 0.0
    %725 = vmatpush1.msra.mxu0 0.0
    %726 = vmatprep.subr.mxu0 0.0
    %727 = vmatpush1.msra.mxu0 0.0
    %728 = vmatprep.subr.mxu0 0.0
    %729 = vmatpush1.msra.mxu0 0.0
    %730 = vmatprep.subr.mxu0 0.0
    %731 = vmatpush1.msra.mxu0 0.0
    %732 = vmatprep.subr.mxu0 0.0
    %733 = vmatpush1.msra.mxu0 0.0
    %734 = vmatprep.subr.mxu0 0.0
    %735 = vmatpush1.msra.mxu0 0.0
    %736 = vmatprep.subr.mxu0 0.0
    %737 = vmatpush1.msra.mxu0 0.0
    %738 = vmatprep.subr.mxu0 0.0
    %739 = vmatpush1.msra.mxu0 0.0
    %740 = vmatprep.subr.mxu0 0.0
    %741 = vmatpush1.msra.mxu0 0.0
    %742 = vmatprep.subr.mxu0 0.0
    %743 = vmatpush1.msra.mxu0 0.0
    %744 = vmatprep.subr.mxu0 0.0
    %745 = vmatpush1.msra.mxu0 0.0
    %746 = vmatprep.subr.mxu0 0.0
    %747 = vmatpush1.msra.mxu0 0.0
    %748 = vmatprep.subr.mxu0 0.0
    %749 = vmatpush1.msra.mxu0 0.0
    %750 = vmatprep.subr.mxu0 0.0
    %751 = vmatpush1.msra.mxu0 0.0
    %752 = vmatprep.subr.mxu0 0.0
    %753 = vmatpush1.msra.mxu0 0.0
    %754 = vmatprep.subr.mxu0 0.0
    %755 = vmatpush1.msra.mxu0 0.0
    %756 = vmatprep.mubr.f32.mxu0 0.0
    %757 = vmatmul.mubr.f32.gmra.mrb[0].mxu0 %v690
    %v758 = vpop.f32.mrb[0].mxu0
    %v759 = vadd.f32 0.0, %v758
    %v760 = vpop.f32.mrb[0].mxu0
    %761 = vdwg.mxu0
    %v762 = vmax.f32 %v759, 0.0
    %v763 = vrcp.pop %v688
    %v764 = vmul.f32 %v762, %v763
    %v765 = vadd.f32 %v764, %v403
    %766 = vst [vmem:[#allocation8] sm:$0xff] %v765
    // Predicated region
    $region34: #{tpu_custom_call.1} parent=1 // pred_check
      _
    $region35: #{tpu_custom_call.1} parent=1 // pred_check_branch
      %768 = sbr.rel (0) target = $region37
    $region36: #{tpu_custom_call.1} parent=1 // pred_region
      %s770 = ssub.s32 128, 128
      %771 = vsyncadd [#allocation4], %s770
      %s773 = sshll.u32 [#allocation8], 4
      %s774 = int_to_ptr.vmem [resolvable:$true] %s773
      %776 = dma.vmem_to_hbm [thread:$0]  %s774, 128, %s5, [#allocation4]
    $region37: #{tpu_custom_call.1} parent=1 // pred_fallthru
      _
    // Predicated region
    $region38: #{tpu_custom_call.1} parent=1 // pred_check
      _
    $region39: #{tpu_custom_call.1} parent=1 // pred_check_branch
      %778 = sbr.rel (0) target = $region41
    $region40: #{tpu_custom_call.1} parent=1 // pred_region
      %779 = dma.done [#allocation4], 128
    $region41: #{tpu_custom_call.1} parent=1 // pred_fallthru
      _
    %780 = vsyncpa [#allocation3], 1
    %781 = vsyncpa [#allocation6], 1
    %782 = vsyncpa [#allocation4], 1

</llo_original>
